<compile_context>
chip_gen: v5e
topology: v5e:2x2
jax: 0.10.0
libtpu: 0.0.40
codegen_flags: <defaults>
</compile_context>

<pallas_src>
import functools

import jax
import jax.numpy as jnp
from jax.experimental import pallas as pl
from jax.experimental.pallas import tpu as pltpu


def _qnet_fused_kernel(*refs, n_layers):
    """Fused MLP forward.

    refs = (x, w0, b0, ..., w_{L-1}, b_{L-1}, w_out_col, b_out, out)
      x         : (TB, In0)     native (batch, features) tile
      w_l       : (Out_l, In_l) PyTorch nn.Linear layout (hidden layers)
      b_l       : (Out_l, 1)
      w_out_col : (H, 1)        final layer weight stored as a column
      b_out     : (1, 1)
      out       : (1, TB)       lane-dense Q row (batch on the lane axis)
    """
    x_ref = refs[0]
    o_ref = refs[-1]
    p = refs[1:-1]

    # One in-kernel transpose of the small x tile -> (In0, TB).  This replaces
    # the host-side transpose+pad of the full x array; XLU slot is idle here.
    h = x_ref[...].astype(jnp.float32).T

    # Hidden layers: MXU matmul with f32 accumulation, f32 bias/ReLU epilogue.
    for layer in range(n_layers):
        w = p[2 * layer][...]                 # (Out, In)
        b = p[2 * layer + 1][...]             # (Out, 1)
        h = jnp.dot(w, h.astype(w.dtype), preferred_element_type=jnp.float32)
        h = jnp.maximum(h + b.astype(jnp.float32), 0.0)

    # Final Out=1 layer off the MXU: VPU broadcast-multiply + sublane reduce.
    w_out = p[2 * n_layers][...].astype(jnp.float32)       # (H, 1)
    b_out = p[2 * n_layers + 1][...].astype(jnp.float32)   # (1, 1)
    q = jnp.sum(h * w_out, axis=0, keepdims=True) + b_out  # (1, TB)
    o_ref[...] = q.astype(o_ref.dtype)


def _round_up(x, m):
    return ((x + m - 1) // m) * m


def qnet_forward(params, t_x, *, batch_tile=1024, param_dtype=None,
                 single_buffer_params=True):
    """QNet.forward: [Linear+ReLU]*n_layers, then Linear(H, 1).

    params: list of (w, b), w in PyTorch layout (out_features, in_features).
    t_x:    (batch, ob_dim + ac_dim) -- consumed in its native layout.
    returns (batch, 1)
    """
    B, in0 = t_x.shape
    n_layers = len(params) - 1
    assert n_layers >= 1, "QNet needs at least one hidden layer"
    assert params[-1][0].shape[0] == 1, "QNet output layer must have 1 unit"

    # --- batch tiling (batch ends up on the output lane axis) ----------------
    if B < 256:
        tb = B                                   # single tile; any B is legal
    elif B <= 2 * batch_tile:
        # Force >= 2 tiles so the "parallel" axis shards across both v7x TCs.
        tb = _round_up(pl.cdiv(B, 2), 128)
    else:
        tb = batch_tile
    grid = (pl.cdiv(B, tb),)
    # Ragged tail tile handled by Pallas: OOB input rows are garbage, but each
    # batch column is independent; OOB output columns are dropped on store.

    # --- args + specs ---------------------------------------------------------
    resident = pl.Buffered(1) if single_buffer_params else None

    def _resident_spec(shape):
        if resident is None:
            return pl.BlockSpec(shape, lambda i: (0, 0))
        return pl.BlockSpec(shape, lambda i: (0, 0), pipeline_mode=resident)

    in_specs = [pl.BlockSpec((tb, in0), lambda i: (i, 0))]
    args = [t_x]
    flops = 0
    param_bytes = 0
    for li, (w, b) in enumerate(params):
        out_f, in_f = w.shape
        if param_dtype is not None:
            w = w.astype(param_dtype)
            b = b.astype(param_dtype)
        if li == n_layers:
            w_arr = w.T                          # (H, 1) column for VPU head
        else:
            w_arr = w                            # (Out, In)
        b_arr = b.reshape(out_f, 1)
        in_specs.append(_resident_spec(w_arr.shape))
        in_specs.append(_resident_spec(b_arr.shape))
        args += [w_arr, b_arr]
        flops += 2 * B * in_f * out_f
        param_bytes += (w_arr.size + b_arr.size) * w_arr.dtype.itemsize

    out_specs = pl.BlockSpec((1, tb), lambda i: (0, i))
    out_shape = jax.ShapeDtypeStruct((1, B), t_x.dtype)

    # --- VMEM budget (override default scoped limit only when needed) --------
    buf = 1 if single_buffer_params else 2
    h_max = max(w.shape[0] for w, _ in params)
    x_bytes = t_x.dtype.itemsize
    vmem_est = (buf * param_bytes
                + 2 * tb * in0 * x_bytes          # double-buffered x tile
                + 2 * tb * x_bytes                # double-buffered out tile
                + 3 * h_max * tb * 4              # live f32 activations
                + tb * in0 * 4)                   # transposed x tile
    compiler_kwargs = dict(dimension_semantics=("parallel",))
    if vmem_est > (16 << 20):                     # smallest default scope (v5e)
        compiler_kwargs["vmem_limit_bytes"] = int(min(vmem_est * 5 // 4,
                                                      64 << 20))

    bytes_accessed = (t_x.size * x_bytes + param_bytes + B * x_bytes)

    kernel = functools.partial(_qnet_fused_kernel, n_layers=n_layers)
    out = pl.pallas_call(
        kernel,
        out_shape=out_shape,
        grid=grid,
        in_specs=in_specs,
        out_specs=out_specs,
        compiler_params=pltpu.CompilerParams(**compiler_kwargs),
        cost_estimate=pl.CostEstimate(
            flops=int(flops), transcendentals=0,
            bytes_accessed=int(bytes_accessed)),
    )(*args)                                      # (1, B), lane-dense
    return out.T                                  # (B, 1), PyTorch layout


def xavier_uniform(key, fan_out, fan_in, dtype=jnp.float32):
    # Matches torch.nn.init.xavier_uniform_ (gain=1) on an (out, in) weight.
    bound = jnp.sqrt(6.0 / (fan_in + fan_out)).astype(dtype)
    return jax.random.uniform(
        key, (fan_out, fan_in), dtype=dtype, minval=-bound, maxval=bound)


def init_qnet_params(key, ob_dim, ac_dim, hidden_size, n_layers,
                     dtype=jnp.float32):
    """Params mirroring build_fnn(ob+ac, 1, n_layers, H), PyTorch layout."""
    params = []
    in_size = ob_dim + ac_dim
    for _ in range(n_layers):
        key, wk = jax.random.split(key)
        w = xavier_uniform(wk, hidden_size, in_size, dtype=dtype)
        b = jnp.zeros((hidden_size,), dtype)   # weight_init only touches .weight
        params.append((w, b))
        in_size = hidden_size
    key, wk = jax.random.split(key)
    params.append((xavier_uniform(wk, 1, hidden_size, dtype=dtype),
                   jnp.zeros((1,), dtype)))
    return params


def _reference_forward(params, t_x):
    """Pure-JAX reference (PyTorch semantics: y = x @ W.T + b)."""
    with jax.default_matmul_precision("highest"):
        h = t_x
        for w, b in params[:-1]:
            h = jnp.maximum(h @ w.T + b, 0.0)
        w_out, b_out = params[-1]
        return h @ w_out.T + b_out


if __name__ == "__main__":
    batch = 8
    ob_dim = 16
    ac_dim = 16
    hidden_size = 32
    n_layers = 2

    key = jax.random.PRNGKey(0)
    key, xk = jax.random.split(key)
    t_x = jax.random.normal(xk, (batch, ob_dim + ac_dim), dtype=jnp.float32)
    params = init_qnet_params(key, ob_dim, ac_dim, hidden_size, n_layers)

    fwd = jax.jit(qnet_forward,
                  static_argnames=("batch_tile", "param_dtype",
                                   "single_buffer_params"))

    def run(p, x, **kw):
        try:
            return fwd(p, x, **kw)
        except Exception:
            # Fallback if single-buffered resident params are unsupported.
            return fwd(p, x, single_buffer_params=False, **kw)

    # Small-batch path (single tile, one fused kernel launch).
    q = run(params, t_x)
    jax.block_until_ready(q)
    assert q.shape == (batch, 1), q.shape
    ref = _reference_forward(params, t_x)
    assert jnp.allclose(q, ref, atol=1e-4, rtol=1e-4)

    # Multi-tile path with a ragged tail (B=300 -> tb=256, grid=2).
    key, xk2 = jax.random.split(key)
    big_batch = 300
    t_x_big = jax.random.normal(xk2, (big_batch, ob_dim + ac_dim),
                                dtype=jnp.float32)
    q_big = run(params, t_x_big)
    jax.block_until_ready(q_big)
    assert q_big.shape == (big_batch, 1), q_big.shape
    ref_big = _reference_forward(params, t_x_big)
    assert jnp.allclose(q_big, ref_big, atol=1e-4, rtol=1e-4)

    # bf16 weights path (v6e/v7x MXU-native; f32 accumulation/epilogue).
    q_bf16 = run(params, t_x_big, param_dtype=jnp.bfloat16)
    jax.block_until_ready(q_bf16)
    assert q_bf16.shape == (big_batch, 1), q_bf16.shape
    assert jnp.allclose(q_bf16, ref_big, atol=5e-2, rtol=5e-2)

    print("KERNEL_OK")
</pallas_src>

<mosaic_0001>
module attributes {stable_mosaic.version = 11 : i64} {
  func.func @_qnet_fused_kernel(%arg0: i32, %arg1: memref<8x32xf32, #tpu.memory_space<vmem>>, %arg2: memref<32x32xf32, #tpu.memory_space<vmem>>, %arg3: memref<32x1xf32, #tpu.memory_space<vmem>>, %arg4: memref<32x32xf32, #tpu.memory_space<vmem>>, %arg5: memref<32x1xf32, #tpu.memory_space<vmem>>, %arg6: memref<32x1xf32, #tpu.memory_space<vmem>>, %arg7: memref<1x1xf32, #tpu.memory_space<vmem>>, %arg8: memref<1x8xf32, #tpu.memory_space<vmem>>) attributes {dimension_semantics = [#tpu.dimension_semantics<parallel>], iteration_bounds = array<i64: 1>, scalar_prefetch = 0 : i64, scratch_operands = 0 : i64, tpu.core_type = #tpu.core_type<tc>, window_params = [{transform_indices = @transform_0, window_bounds = array<i64: 8, 32>}, {pipeline_mode = #tpu.pipeline_mode<synchronous>, transform_indices = @transform_1, window_bounds = array<i64: 32, 32>}, {pipeline_mode = #tpu.pipeline_mode<synchronous>, transform_indices = @transform_2, window_bounds = array<i64: 32, 1>}, {pipeline_mode = #tpu.pipeline_mode<synchronous>, transform_indices = @transform_3, window_bounds = array<i64: 32, 32>}, {pipeline_mode = #tpu.pipeline_mode<synchronous>, transform_indices = @transform_4, window_bounds = array<i64: 32, 1>}, {pipeline_mode = #tpu.pipeline_mode<synchronous>, transform_indices = @transform_5, window_bounds = array<i64: 32, 1>}, {pipeline_mode = #tpu.pipeline_mode<synchronous>, transform_indices = @transform_6, window_bounds = array<i64: 1, 1>}, {transform_indices = @transform_7, window_bounds = array<i64: 1, 8>}]} {
    %c0 = arith.constant 0 : index
    %c0_0 = arith.constant 0 : index
    %0 = vector.load %arg1[%c0, %c0_0] : memref<8x32xf32, #tpu.memory_space<vmem>>, vector<8x32xf32>
    %1 = tpu.transpose %0, [1, 0] : vector<8x32xf32> -> vector<32x8xf32>
    %c0_1 = arith.constant 0 : index
    %c0_2 = arith.constant 0 : index
    %2 = vector.load %arg2[%c0_1, %c0_2] : memref<32x32xf32, #tpu.memory_space<vmem>>, vector<32x32xf32>
    %c0_3 = arith.constant 0 : index
    %c0_4 = arith.constant 0 : index
    %3 = vector.load %arg3[%c0_3, %c0_4] : memref<32x1xf32, #tpu.memory_space<vmem>>, vector<32x1xf32>
    %cst = arith.constant dense<0.000000e+00> : vector<32x8xf32>
    %4 = tpu.matmul %2, %1, %cst {dimension_numbers = #tpu.dot_dimension_numbers<[1], [0], [0], [1], [0, 0, 1, 1], [], []>} : vector<32x32xf32>, vector<32x8xf32>, vector<32x8xf32> -> vector<32x8xf32>
    %5 = vector.broadcast %3 : vector<32x1xf32> to vector<32x8xf32>
    %6 = arith.addf %4, %5 : vector<32x8xf32>
    %cst_5 = arith.constant 0.000000e+00 : f32
    %7 = vector.broadcast %cst_5 : f32 to vector<32x8xf32>
    %8 = arith.maximumf %6, %7 : vector<32x8xf32>
    %c0_6 = arith.constant 0 : index
    %c0_7 = arith.constant 0 : index
    %9 = vector.load %arg4[%c0_6, %c0_7] : memref<32x32xf32, #tpu.memory_space<vmem>>, vector<32x32xf32>
    %c0_8 = arith.constant 0 : index
    %c0_9 = arith.constant 0 : index
    %10 = vector.load %arg5[%c0_8, %c0_9] : memref<32x1xf32, #tpu.memory_space<vmem>>, vector<32x1xf32>
    %cst_10 = arith.constant dense<0.000000e+00> : vector<32x8xf32>
    %11 = tpu.matmul %9, %8, %cst_10 {dimension_numbers = #tpu.dot_dimension_numbers<[1], [0], [0], [1], [0, 0, 1, 1], [], []>} : vector<32x32xf32>, vector<32x8xf32>, vector<32x8xf32> -> vector<32x8xf32>
    %12 = vector.broadcast %10 : vector<32x1xf32> to vector<32x8xf32>
    %13 = arith.addf %11, %12 : vector<32x8xf32>
    %cst_11 = arith.constant 0.000000e+00 : f32
    %14 = vector.broadcast %cst_11 : f32 to vector<32x8xf32>
    %15 = arith.maximumf %13, %14 : vector<32x8xf32>
    %c0_12 = arith.constant 0 : index
    %c0_13 = arith.constant 0 : index
    %16 = vector.load %arg6[%c0_12, %c0_13] : memref<32x1xf32, #tpu.memory_space<vmem>>, vector<32x1xf32>
    %c0_14 = arith.constant 0 : index
    %c0_15 = arith.constant 0 : index
    %17 = vector.load %arg7[%c0_14, %c0_15] : memref<1x1xf32, #tpu.memory_space<vmem>>, vector<1x1xf32>
    %18 = vector.broadcast %16 : vector<32x1xf32> to vector<32x8xf32>
    %19 = arith.mulf %15, %18 : vector<32x8xf32>
    %cst_16 = arith.constant dense<0.000000e+00> : vector<8xf32>
    %20 = vector.multi_reduction <add>, %19, %cst_16 [0] : vector<32x8xf32> to vector<8xf32>
    %21 = vector.shape_cast %20 : vector<8xf32> to vector<1x8xf32>
    %22 = vector.broadcast %17 : vector<1x1xf32> to vector<1x8xf32>
    %23 = arith.addf %21, %22 : vector<1x8xf32>
    %c0_17 = arith.constant 0 : index
    %c0_18 = arith.constant 0 : index
    %24 = vector.load %arg8[%c0_17, %c0_18] : memref<1x8xf32, #tpu.memory_space<vmem>>, vector<1x8xf32>
    tpu.vector_store %arg8[%c0_17, %c0_18], %23 {strides = array<i32>} : memref<1x8xf32, #tpu.memory_space<vmem>>, vector<1x8xf32>,
    return
  }
  func.func @transform_0(%arg0: i32) -> (i32, i32) {
    %c0_i32 = arith.constant 0 : i32
    %c0_i32_0 = arith.constant 0 : i32
    return %arg0, %c0_i32 : i32, i32
  }
  func.func @transform_1(%arg0: i32) -> (i32, i32) {
    %c0_i32 = arith.constant 0 : i32
    %c0_i32_0 = arith.constant 0 : i32
    %c0_i32_1 = arith.constant 0 : i32
    return %c0_i32, %c0_i32_0 : i32, i32
  }
  func.func @transform_2(%arg0: i32) -> (i32, i32) {
    %c0_i32 = arith.constant 0 : i32
    %c0_i32_0 = arith.constant 0 : i32
    %c0_i32_1 = arith.constant 0 : i32
    return %c0_i32, %c0_i32_0 : i32, i32
  }
  func.func @transform_3(%arg0: i32) -> (i32, i32) {
    %c0_i32 = arith.constant 0 : i32
    %c0_i32_0 = arith.constant 0 : i32
    %c0_i32_1 = arith.constant 0 : i32
    return %c0_i32, %c0_i32_0 : i32, i32
  }
  func.func @transform_4(%arg0: i32) -> (i32, i32) {
    %c0_i32 = arith.constant 0 : i32
    %c0_i32_0 = arith.constant 0 : i32
    %c0_i32_1 = arith.constant 0 : i32
    return %c0_i32, %c0_i32_0 : i32, i32
  }
  func.func @transform_5(%arg0: i32) -> (i32, i32) {
    %c0_i32 = arith.constant 0 : i32
    %c0_i32_0 = arith.constant 0 : i32
    %c0_i32_1 = arith.constant 0 : i32
    return %c0_i32, %c0_i32_0 : i32, i32
  }
  func.func @transform_6(%arg0: i32) -> (i32, i32) {
    %c0_i32 = arith.constant 0 : i32
    %c0_i32_0 = arith.constant 0 : i32
    %c0_i32_1 = arith.constant 0 : i32
    return %c0_i32, %c0_i32_0 : i32, i32
  }
  func.func @transform_7(%arg0: i32) -> (i32, i32) {
    %c0_i32 = arith.constant 0 : i32
    %c0_i32_0 = arith.constant 0 : i32
    return %c0_i32, %arg0 : i32, i32
  }
}

module attributes {stable_mosaic.version = 11 : i64} {
  func.func @_qnet_fused_kernel(%arg0: i32, %arg1: memref<8x32xf32, #tpu.memory_space<vmem>>, %arg2: memref<32x32xf32, #tpu.memory_space<vmem>>, %arg3: memref<32x1xf32, #tpu.memory_space<vmem>>, %arg4: memref<32x32xf32, #tpu.memory_space<vmem>>, %arg5: memref<32x1xf32, #tpu.memory_space<vmem>>, %arg6: memref<32x1xf32, #tpu.memory_space<vmem>>, %arg7: memref<1x1xf32, #tpu.memory_space<vmem>>, %arg8: memref<1x8xf32, #tpu.memory_space<vmem>>) attributes {dimension_semantics = [#tpu.dimension_semantics<parallel>], iteration_bounds = array<i64: 1>, scalar_prefetch = 0 : i64, scratch_operands = 0 : i64, tpu.core_type = #tpu.core_type<tc>, window_params = [{transform_indices = @transform_0, window_bounds = array<i64: 8, 32>}, {pipeline_mode = #tpu.pipeline_mode<synchronous>, transform_indices = @transform_1, window_bounds = array<i64: 32, 32>}, {pipeline_mode = #tpu.pipeline_mode<synchronous>, transform_indices = @transform_2, window_bounds = array<i64: 32, 1>}, {pipeline_mode = #tpu.pipeline_mode<synchronous>, transform_indices = @transform_3, window_bounds = array<i64: 32, 32>}, {pipeline_mode = #tpu.pipeline_mode<synchronous>, transform_indices = @transform_4, window_bounds = array<i64: 32, 1>}, {pipeline_mode = #tpu.pipeline_mode<synchronous>, transform_indices = @transform_5, window_bounds = array<i64: 32, 1>}, {pipeline_mode = #tpu.pipeline_mode<synchronous>, transform_indices = @transform_6, window_bounds = array<i64: 1, 1>}, {transform_indices = @transform_7, window_bounds = array<i64: 1, 8>}]} {
    %c0 = arith.constant 0 : index
    %c0_0 = arith.constant 0 : index
    %0 = vector.load %arg1[%c0, %c0_0] : memref<8x32xf32, #tpu.memory_space<vmem>>, vector<8x32xf32>
    %1 = tpu.transpose %0, [1, 0] : vector<8x32xf32> -> vector<32x8xf32>
    %c0_1 = arith.constant 0 : index
    %c0_2 = arith.constant 0 : index
    %2 = vector.load %arg2[%c0_1, %c0_2] : memref<32x32xf32, #tpu.memory_space<vmem>>, vector<32x32xf32>
    %c0_3 = arith.constant 0 : index
    %c0_4 = arith.constant 0 : index
    %3 = vector.load %arg3[%c0_3, %c0_4] : memref<32x1xf32, #tpu.memory_space<vmem>>, vector<32x1xf32>
    %cst = arith.constant dense<0.000000e+00> : vector<32x8xf32>
    %4 = tpu.matmul %2, %1, %cst {dimension_numbers = #tpu.dot_dimension_numbers<[1], [0], [0], [1], [0, 0, 1, 1], [], []>} : vector<32x32xf32>, vector<32x8xf32>, vector<32x8xf32> -> vector<32x8xf32>
    %5 = vector.broadcast %3 : vector<32x1xf32> to vector<32x8xf32>
    %6 = arith.addf %4, %5 : vector<32x8xf32>
    %cst_5 = arith.constant 0.000000e+00 : f32
    %7 = vector.broadcast %cst_5 : f32 to vector<32x8xf32>
    %8 = arith.maximumf %6, %7 : vector<32x8xf32>
    %c0_6 = arith.constant 0 : index
    %c0_7 = arith.constant 0 : index
    %9 = vector.load %arg4[%c0_6, %c0_7] : memref<32x32xf32, #tpu.memory_space<vmem>>, vector<32x32xf32>
    %c0_8 = arith.constant 0 : index
    %c0_9 = arith.constant 0 : index
    %10 = vector.load %arg5[%c0_8, %c0_9] : memref<32x1xf32, #tpu.memory_space<vmem>>, vector<32x1xf32>
    %cst_10 = arith.constant dense<0.000000e+00> : vector<32x8xf32>
    %11 = tpu.matmul %9, %8, %cst_10 {dimension_numbers = #tpu.dot_dimension_numbers<[1], [0], [0], [1], [0, 0, 1, 1], [], []>} : vector<32x32xf32>, vector<32x8xf32>, vector<32x8xf32> -> vector<32x8xf32>
    %12 = vector.broadcast %10 : vector<32x1xf32> to vector<32x8xf32>
    %13 = arith.addf %11, %12 : vector<32x8xf32>
    %cst_11 = arith.constant 0.000000e+00 : f32
    %14 = vector.broadcast %cst_11 : f32 to vector<32x8xf32>
    %15 = arith.maximumf %13, %14 : vector<32x8xf32>
    %c0_12 = arith.constant 0 : index
    %c0_13 = arith.constant 0 : index
    %16 = vector.load %arg6[%c0_12, %c0_13] : memref<32x1xf32, #tpu.memory_space<vmem>>, vector<32x1xf32>
    %c0_14 = arith.constant 0 : index
    %c0_15 = arith.constant 0 : index
    %17 = vector.load %arg7[%c0_14, %c0_15] : memref<1x1xf32, #tpu.memory_space<vmem>>, vector<1x1xf32>
    %18 = vector.broadcast %16 : vector<32x1xf32> to vector<32x8xf32>
    %19 = arith.mulf %15, %18 : vector<32x8xf32>
    %cst_16 = arith.constant dense<0.000000e+00> : vector<8xf32>
    %20 = vector.multi_reduction <add>, %19, %cst_16 [0] : vector<32x8xf32> to vector<8xf32>
    %21 = vector.shape_cast %20 : vector<8xf32> to vector<1x8xf32>
    %22 = vector.broadcast %17 : vector<1x1xf32> to vector<1x8xf32>
    %23 = arith.addf %21, %22 : vector<1x8xf32>
    %c0_17 = arith.constant 0 : index
    %c0_18 = arith.constant 0 : index
    %24 = vector.load %arg8[%c0_17, %c0_18] : memref<1x8xf32, #tpu.memory_space<vmem>>, vector<1x8xf32>
    tpu.vector_store %arg8[%c0_17, %c0_18], %23 {strides = array<i32>} : memref<1x8xf32, #tpu.memory_space<vmem>>, vector<1x8xf32>,
    return
  }
  func.func @transform_0(%arg0: i32) -> (i32, i32) {
    %c0_i32 = arith.constant 0 : i32
    %c0_i32_0 = arith.constant 0 : i32
    return %arg0, %c0_i32 : i32, i32
  }
  func.func @transform_1(%arg0: i32) -> (i32, i32) {
    %c0_i32 = arith.constant 0 : i32
    %c0_i32_0 = arith.constant 0 : i32
    %c0_i32_1 = arith.constant 0 : i32
    return %c0_i32, %c0_i32_0 : i32, i32
  }
  func.func @transform_2(%arg0: i32) -> (i32, i32) {
    %c0_i32 = arith.constant 0 : i32
    %c0_i32_0 = arith.constant 0 : i32
    %c0_i32_1 = arith.constant 0 : i32
    return %c0_i32, %c0_i32_0 : i32, i32
  }
  func.func @transform_3(%arg0: i32) -> (i32, i32) {
    %c0_i32 = arith.constant 0 : i32
    %c0_i32_0 = arith.constant 0 : i32
    %c0_i32_1 = arith.constant 0 : i32
    return %c0_i32, %c0_i32_0 : i32, i32
  }
  func.func @transform_4(%arg0: i32) -> (i32, i32) {
    %c0_i32 = arith.constant 0 : i32
    %c0_i32_0 = arith.constant 0 : i32
    %c0_i32_1 = arith.constant 0 : i32
    return %c0_i32, %c0_i32_0 : i32, i32
  }
  func.func @transform_5(%arg0: i32) -> (i32, i32) {
    %c0_i32 = arith.constant 0 : i32
    %c0_i32_0 = arith.constant 0 : i32
    %c0_i32_1 = arith.constant 0 : i32
    return %c0_i32, %c0_i32_0 : i32, i32
  }
  func.func @transform_6(%arg0: i32) -> (i32, i32) {
    %c0_i32 = arith.constant 0 : i32
    %c0_i32_0 = arith.constant 0 : i32
    %c0_i32_1 = arith.constant 0 : i32
    return %c0_i32, %c0_i32_0 : i32, i32
  }
  func.func @transform_7(%arg0: i32) -> (i32, i32) {
    %c0_i32 = arith.constant 0 : i32
    %c0_i32_0 = arith.constant 0 : i32
    return %c0_i32, %arg0 : i32, i32
  }
}

</mosaic_0001>

<llo_original>
// kernel: qnet_forward.1
$region0: #{qnet_forward.1}
  #allocation0 [shape = 'u32[]', space=smem, size = 0x4, offset = 0x4, fixed_abs, tag = 'smem constant byte address 0x4 - core index']
  #allocation1 [shape = 'u32[72,128]{1,0:T(1,128)}', space=vmem, size = 0x9000, scoped, tag = 'internal scratch']
  #allocation2 [shape = 'f32[1,1]{1,0:T(1,128)S(1)}', space=vmem, size = 0x200, scoped, tag = 'scoped memory for qnet_forward.1']
  %s0 = inlined_call_operand.vmem [shape: f32[8,32], index: 0, kind: input, shape index: {}]
  %s1 = inlined_call_operand.vmem [shape: f32[32,32], index: 1, kind: input, shape index: {}]
  %s2 = inlined_call_operand.vmem [shape: f32[32,1], index: 2, kind: input, shape index: {}]
  %s3 = inlined_call_operand.vmem [shape: f32[32,32], index: 3, kind: input, shape index: {}]
  %s4 = inlined_call_operand.vmem [shape: f32[32,1], index: 4, kind: input, shape index: {}]
  %s5 = inlined_call_operand.vmem [shape: f32[32,1], index: 5, kind: input, shape index: {}]
  %s6 = inlined_call_operand.<no memory space> [shape: f32[1,1], index: 6, kind: input, shape index: {}]
  %s7 = inlined_call_operand.hbm [shape: f32[1,8], index: 7, kind: output, shape index: {}]
  %s8 = sld [smem:[#allocation0]]
  $region38: #{qnet_forward.1} parent=0
    _
  %s10 = ssub.s32 1, %s8
  %s11 = scalar_select 0, %s10, %s8
  %v12 = vstv %s6
  %13 = vst [vmem:[#allocation2] sm:$0x1] %v12
  $region1: #{qnet_forward.1} parent=0
    #allocation3 [shape = 'u8[512]{0}', space=vmem, size = 0x400, scoped, tag = 'output window, operand 0, single buffered']
    #allocation4 [shape = 's32[1]{0}', space=sflag, size = 0x4, scoped, tag = 'scoped memory for qnet_forward.1']
    %14 = vsyncpa [#allocation4], 0
    // Predicated region
    $region2: #{qnet_forward.1} parent=1 // pred_check
      _
    $region3: #{qnet_forward.1} parent=1 // pred_check_branch
      %16 = sbr.rel (0) target = $region5
    $region4: #{qnet_forward.1} parent=1 // pred_region
      _
    $region5: #{qnet_forward.1} parent=1 // pred_fallthru
      _
    // Predicated region
    $region6: #{qnet_forward.1} parent=1 // pred_check
      _
    $region7: #{qnet_forward.1} parent=1 // pred_check_branch
      %18 = sbr.rel (0) target = $region9
    $region8: #{qnet_forward.1} parent=1 // pred_region
      _
    $region9: #{qnet_forward.1} parent=1 // pred_fallthru
      _
    // Predicated region
    $region10: #{qnet_forward.1} parent=1 // pred_check
      _
    $region11: #{qnet_forward.1} parent=1 // pred_check_branch
      %20 = sbr.rel (0) target = $region13
    $region12: #{qnet_forward.1} parent=1 // pred_region
      _
    $region13: #{qnet_forward.1} parent=1 // pred_fallthru
      _
    // Predicated region
    $region14: #{qnet_forward.1} parent=1 // pred_check
      _
    $region15: #{qnet_forward.1} parent=1 // pred_check_branch
      %22 = sbr.rel (0) target = $region17
    $region16: #{qnet_forward.1} parent=1 // pred_region
      _
    $region17: #{qnet_forward.1} parent=1 // pred_fallthru
      _
    // Predicated region
    $region18: #{qnet_forward.1} parent=1 // pred_check
      _
    $region19: #{qnet_forward.1} parent=1 // pred_check_branch
      %24 = sbr.rel (0) target = $region21
    $region20: #{qnet_forward.1} parent=1 // pred_region
      _
    $region21: #{qnet_forward.1} parent=1 // pred_fallthru
      _
    // Predicated region
    $region22: #{qnet_forward.1} parent=1 // pred_check
      _
    $region23: #{qnet_forward.1} parent=1 // pred_check_branch
      %26 = sbr.rel (0) target = $region25
    $region24: #{qnet_forward.1} parent=1 // pred_region
      _
    $region25: #{qnet_forward.1} parent=1 // pred_fallthru
      _
    // Predicated region
    $region26: #{qnet_forward.1} parent=1 // pred_check
      _
    $region27: #{qnet_forward.1} parent=1 // pred_check_branch
      %28 = sbr.rel (0) target = $region29
    $region28: #{qnet_forward.1} parent=1 // pred_region
      _
    $region29: #{qnet_forward.1} parent=1 // pred_fallthru
      _
    %v29 = vld [vmem:[%s0] sm:$0xff]
    %v30 = vld [vmem:[%s1] sm:$0xff]
    %v31 = vld [vmem:[%s1 + $0x8] sm:$0xff]
    %v32 = vld [vmem:[%s1 + $0x10] sm:$0xff]
    %v33 = vld [vmem:[%s1 + $0x18] sm:$0xff]
    %v34 = vld [vmem:[%s2] sm:$0xff]
    %v35 = vld [vmem:[%s2 + $0x8] sm:$0xff]
    %v36 = vld [vmem:[%s2 + $0x10] sm:$0xff]
    %v37 = vld [vmem:[%s2 + $0x18] sm:$0xff]
    %39 = vset.pattern.permute.xlu0 0
    %40 = vperm.xlu0 %39, %v34
    %v41 = vpop.permute.xlu0 %40
    %44 = vset.pattern.permute.xlu0 0
    %45 = vperm.xlu0 %44, %v35
    %v46 = vpop.permute.xlu0 %45
    %49 = vset.pattern.permute.xlu0 0
    %50 = vperm.xlu0 %49, %v36
    %v51 = vpop.permute.xlu0 %50
    %54 = vset.pattern.permute.xlu0 0
    %55 = vperm.xlu0 %54, %v37
    %v56 = vpop.permute.xlu0 %55
    %vm58 = vcmask 261120
    %v60 = vsel %vm58, %v30, 0
    %v63 = vsel %vm58, %v31, 0
    %v66 = vsel %vm58, %v32, 0
    %v69 = vsel %vm58, %v33, 0
    %v72 = vsel %vm58, %v29, 0
    %74 = vmatpush.xpose.msra.mxu0 0.0
    %75 = vmatpush.xpose.msra.mxu0 0.0
    %76 = vmatpush.xpose.msra.mxu0 0.0
    %77 = vmatpush.xpose.msra.mxu0 0.0
    %78 = vmatpush.xpose.msra.mxu0 0.0
    %79 = vmatpush.xpose.msra.mxu0 0.0
    %80 = vmatpush.xpose.msra.mxu0 0.0
    %81 = vmatpush.xpose.msra.mxu0 0.0
    %82 = vmatpush.xpose.msra.mxu0 0.0
    %83 = vmatpush.xpose.msra.mxu0 0.0
    %84 = vmatpush.xpose.msra.mxu0 0.0
    %85 = vmatpush.xpose.msra.mxu0 0.0
    %86 = vmatpush.xpose.msra.mxu0 0.0
    %87 = vmatpush.xpose.msra.mxu0 0.0
    %88 = vmatpush.xpose.msra.mxu0 0.0
    %89 = vmatpush.xpose.msra.mxu0 %v72
    %90 = vmatmul.f32.gmra.mxu0 %v60
    %v91 = vpop.f32.mrf.mxu0
    %v92 = vadd.f32 %v41, %v91
    %93 = vmatmul.f32.gmra.mxu0 %v63
    %v94 = vpop.f32.mrf.mxu0
    %v95 = vadd.f32 %v46, %v94
    %96 = vmatmul.f32.gmra.mxu0 %v66
    %v97 = vpop.f32.mrf.mxu0
    %v98 = vadd.f32 %v51, %v97
    %99 = vmatmul.f32.gmra.mxu0 %v69
    %v100 = vpop.f32.mrf.mxu0
    %v101 = vadd.f32 %v56, %v100
    %102 = vdwg.mxu0
    %v103 = vmax.f32 %v92, 0.0
    %v104 = vmax.f32 %v95, 0.0
    %v105 = vmax.f32 %v98, 0.0
    %v106 = vmax.f32 %v101, 0.0
    %v107 = vld [vmem:[%s3] sm:$0xff]
    %v108 = vld [vmem:[%s3 + $0x8] sm:$0xff]
    %v109 = vld [vmem:[%s3 + $0x10] sm:$0xff]
    %v110 = vld [vmem:[%s3 + $0x18] sm:$0xff]
    %v111 = vld [vmem:[%s4] sm:$0xff]
    %v112 = vld [vmem:[%s4 + $0x8] sm:$0xff]
    %v113 = vld [vmem:[%s4 + $0x10] sm:$0xff]
    %v114 = vld [vmem:[%s4 + $0x18] sm:$0xff]
    %116 = vset.pattern.permute.xlu0 0
    %117 = vperm.xlu0 %116, %v111
    %v118 = vpop.permute.xlu0 %117
    %121 = vset.pattern.permute.xlu0 0
    %122 = vperm.xlu0 %121, %v112
    %v123 = vpop.permute.xlu0 %122
    %126 = vset.pattern.permute.xlu0 0
    %127 = vperm.xlu0 %126, %v113
    %v128 = vpop.permute.xlu0 %127
    %131 = vset.pattern.permute.xlu0 0
    %132 = vperm.xlu0 %131, %v114
    %v133 = vpop.permute.xlu0 %132
    %v136 = vsel %vm58, %v107, 0
    %v139 = vsel %vm58, %v108, 0
    %v142 = vsel %vm58, %v109, 0
    %v145 = vsel %vm58, %v110, 0
    %147 = vmatpush.msra.mxu0 0.0
    %148 = vmatpush.msra.mxu0 0.0
    %149 = vmatpush.msra.mxu0 0.0
    %150 = vmatpush.msra.mxu0 0.0
    %151 = vmatpush.msra.mxu0 0.0
    %152 = vmatpush.msra.mxu0 0.0
    %153 = vmatpush.msra.mxu0 0.0
    %154 = vmatpush.msra.mxu0 0.0
    %155 = vmatpush.msra.mxu0 0.0
    %156 = vmatpush.msra.mxu0 0.0
    %157 = vmatpush.msra.mxu0 0.0
    %158 = vmatpush.msra.mxu0 0.0
    %159 = vmatpush.msra.mxu0 %v106
    %160 = vmatpush.msra.mxu0 %v105
    %161 = vmatpush.msra.mxu0 %v104
    %162 = vmatpush.msra.mxu0 %v103
    %163 = vmatmul.f32.gmra.mxu0 %v136
    %v164 = vpop.f32.mrf.mxu0
    %v165 = vadd.f32 %v118, %v164
    %166 = vmatmul.f32.gmra.mxu0 %v139
    %v167 = vpop.f32.mrf.mxu0
    %v168 = vadd.f32 %v123, %v167
    %169 = vmatmul.f32.gmra.mxu0 %v142
    %v170 = vpop.f32.mrf.mxu0
    %v171 = vadd.f32 %v128, %v170
    %172 = vmatmul.f32.gmra.mxu0 %v145
    %v173 = vpop.f32.mrf.mxu0
    %v174 = vadd.f32 %v133, %v173
    %175 = vdwg.mxu0
    %v176 = vmax.f32 %v165, 0.0
    %v177 = vmax.f32 %v168, 0.0
    %v178 = vmax.f32 %v171, 0.0
    %v179 = vmax.f32 %v174, 0.0
    %v180 = vld [vmem:[%s5] sm:$0xff]
    %v181 = vld [vmem:[%s5 + $0x8] sm:$0xff]
    %v182 = vld [vmem:[%s5 + $0x10] sm:$0xff]
    %v183 = vld [vmem:[%s5 + $0x18] sm:$0xff]
    %v184 = vld [vmem:[#allocation2] sm:$0x1]
    %186 = vset.pattern.permute.xlu0 0
    %187 = vperm.xlu0 %186, %v180
    %v188 = vpop.permute.xlu0 %187
    %191 = vset.pattern.permute.xlu0 0
    %192 = vperm.xlu0 %191, %v181
    %v193 = vpop.permute.xlu0 %192
    %196 = vset.pattern.permute.xlu0 0
    %197 = vperm.xlu0 %196, %v182
    %v198 = vpop.permute.xlu0 %197
    %201 = vset.pattern.permute.xlu0 0
    %202 = vperm.xlu0 %201, %v183
    %v203 = vpop.permute.xlu0 %202
    %v205 = vmul.f32 %v176, %v188
    %v206 = vmul.f32 %v177, %v193
    %v207 = vmul.f32 %v178, %v198
    %v208 = vmul.f32 %v179, %v203
    %vm209 = vcmask 64512
    %v210 = vsel %vm209, %v205, 0.0
    %v211 = vsel %vm209, %v206, 0.0
    %v212 = vadd.f32 %v210, %v211
    %v213 = vsel %vm209, %v207, 0.0
    %v214 = vadd.f32 %v212, %v213
    %v215 = vsel %vm209, %v208, 0.0
    %v216 = vadd.f32 %v214, %v215
    %v217 = vrot.slane %v216, 4
    %v218 = vadd.f32 %v216, %v217
    %v219 = vrot.slane %v218, 2
    %v220 = vadd.f32 %v218, %v219
    %v221 = vrot.slane %v220, 1
    %v222 = vadd.f32 %v220, %v221
    %224 = vset.pattern.permute.xlu0 0
    %225 = vperm.xlu0 %224, %v184
    %v226 = vpop.permute.xlu0 %225
    %v228 = vperm.slane %v226, 0
    %v229 = vadd.f32 %v222, %v228
    %vm230 = vcmask 57344
    %231 = vst.msk [vmem:[#allocation3] sm:$0x1] %vm230, %v229
    // Predicated region
    $region30: #{qnet_forward.1} parent=1 // pred_check
      _
    $region31: #{qnet_forward.1} parent=1 // pred_check_branch
      %233 = sbr.rel (0) target = $region33
    $region32: #{qnet_forward.1} parent=1 // pred_region
      %235 = vsyncadd [#allocation4], 0
      %s237 = sshll.u32 [#allocation3], 4
      %s238 = int_to_ptr.vmem [resolvable:$true] %s237
      %s239 = sshll.u32 %s7, 4
      %s240 = int_to_ptr.hbm [resolvable:$true] %s239
      %242 = dma.vmem_to_hbm [thread:$0]  %s238, 16, %s240, [#allocation4]
    $region33: #{qnet_forward.1} parent=1 // pred_fallthru
      _
    // Predicated region
    $region34: #{qnet_forward.1} parent=1 // pred_check
      _
    $region35: #{qnet_forward.1} parent=1 // pred_check_branch
      %244 = sbr.rel (0) target = $region37
    $region36: #{qnet_forward.1} parent=1 // pred_region
      %246 = dma.done [#allocation4], 16
    $region37: #{qnet_forward.1} parent=1 // pred_fallthru
      _
    %247 = vsyncpa [#allocation4], 1

// kernel: qnet_forward.1
$region0: #{qnet_forward.1}
  #allocation0 [shape = 'u32[]', space=smem, size = 0x4, offset = 0x4, fixed_abs, tag = 'smem constant byte address 0x4 - core index']
  #allocation1 [shape = 'u32[72,128]{1,0:T(1,128)}', space=vmem, size = 0x9000, scoped, tag = 'internal scratch']
  #allocation2 [shape = 'f32[1,1]{1,0:T(1,128)S(1)}', space=vmem, size = 0x200, scoped, tag = 'scoped memory for qnet_forward.1']
  %s0 = inlined_call_operand.vmem [shape: f32[8,32], index: 0, kind: input, shape index: {}]
  %s1 = inlined_call_operand.vmem [shape: f32[32,32], index: 1, kind: input, shape index: {}]
  %s2 = inlined_call_operand.vmem [shape: f32[32,1], index: 2, kind: input, shape index: {}]
  %s3 = inlined_call_operand.vmem [shape: f32[32,32], index: 3, kind: input, shape index: {}]
  %s4 = inlined_call_operand.vmem [shape: f32[32,1], index: 4, kind: input, shape index: {}]
  %s5 = inlined_call_operand.vmem [shape: f32[32,1], index: 5, kind: input, shape index: {}]
  %s6 = inlined_call_operand.<no memory space> [shape: f32[1,1], index: 6, kind: input, shape index: {}]
  %s7 = inlined_call_operand.hbm [shape: f32[1,8], index: 7, kind: output, shape index: {}]
  %s8 = sld [smem:[#allocation0]]
  $region38: #{qnet_forward.1} parent=0
    _
  %s10 = ssub.s32 1, %s8
  %s11 = scalar_select 0, %s10, %s8
  %v12 = vstv %s6
  %13 = vst [vmem:[#allocation2] sm:$0x1] %v12
  $region1: #{qnet_forward.1} parent=0
    #allocation3 [shape = 'u8[512]{0}', space=vmem, size = 0x400, scoped, tag = 'output window, operand 0, single buffered']
    #allocation4 [shape = 's32[1]{0}', space=sflag, size = 0x4, scoped, tag = 'scoped memory for qnet_forward.1']
    %14 = vsyncpa [#allocation4], 0
    // Predicated region
    $region2: #{qnet_forward.1} parent=1 // pred_check
      _
    $region3: #{qnet_forward.1} parent=1 // pred_check_branch
      %16 = sbr.rel (0) target = $region5
    $region4: #{qnet_forward.1} parent=1 // pred_region
      _
    $region5: #{qnet_forward.1} parent=1 // pred_fallthru
      _
    // Predicated region
    $region6: #{qnet_forward.1} parent=1 // pred_check
      _
    $region7: #{qnet_forward.1} parent=1 // pred_check_branch
      %18 = sbr.rel (0) target = $region9
    $region8: #{qnet_forward.1} parent=1 // pred_region
      _
    $region9: #{qnet_forward.1} parent=1 // pred_fallthru
      _
    // Predicated region
    $region10: #{qnet_forward.1} parent=1 // pred_check
      _
    $region11: #{qnet_forward.1} parent=1 // pred_check_branch
      %20 = sbr.rel (0) target = $region13
    $region12: #{qnet_forward.1} parent=1 // pred_region
      _
    $region13: #{qnet_forward.1} parent=1 // pred_fallthru
      _
    // Predicated region
    $region14: #{qnet_forward.1} parent=1 // pred_check
      _
    $region15: #{qnet_forward.1} parent=1 // pred_check_branch
      %22 = sbr.rel (0) target = $region17
    $region16: #{qnet_forward.1} parent=1 // pred_region
      _
    $region17: #{qnet_forward.1} parent=1 // pred_fallthru
      _
    // Predicated region
    $region18: #{qnet_forward.1} parent=1 // pred_check
      _
    $region19: #{qnet_forward.1} parent=1 // pred_check_branch
      %24 = sbr.rel (0) target = $region21
    $region20: #{qnet_forward.1} parent=1 // pred_region
      _
    $region21: #{qnet_forward.1} parent=1 // pred_fallthru
      _
    // Predicated region
    $region22: #{qnet_forward.1} parent=1 // pred_check
      _
    $region23: #{qnet_forward.1} parent=1 // pred_check_branch
      %26 = sbr.rel (0) target = $region25
    $region24: #{qnet_forward.1} parent=1 // pred_region
      _
    $region25: #{qnet_forward.1} parent=1 // pred_fallthru
      _
    // Predicated region
    $region26: #{qnet_forward.1} parent=1 // pred_check
      _
    $region27: #{qnet_forward.1} parent=1 // pred_check_branch
      %28 = sbr.rel (0) target = $region29
    $region28: #{qnet_forward.1} parent=1 // pred_region
      _
    $region29: #{qnet_forward.1} parent=1 // pred_fallthru
      _
    %v29 = vld [vmem:[%s0] sm:$0xff]
    %v30 = vld [vmem:[%s1] sm:$0xff]
    %v31 = vld [vmem:[%s1 + $0x8] sm:$0xff]
    %v32 = vld [vmem:[%s1 + $0x10] sm:$0xff]
    %v33 = vld [vmem:[%s1 + $0x18] sm:$0xff]
    %v34 = vld [vmem:[%s2] sm:$0xff]
    %v35 = vld [vmem:[%s2 + $0x8] sm:$0xff]
    %v36 = vld [vmem:[%s2 + $0x10] sm:$0xff]
    %v37 = vld [vmem:[%s2 + $0x18] sm:$0xff]
    %39 = vset.pattern.permute.xlu0 0
    %40 = vperm.xlu0 %39, %v34
    %v41 = vpop.permute.xlu0 %40
    %44 = vset.pattern.permute.xlu0 0
    %45 = vperm.xlu0 %44, %v35
    %v46 = vpop.permute.xlu0 %45
    %49 = vset.pattern.permute.xlu0 0
    %50 = vperm.xlu0 %49, %v36
    %v51 = vpop.permute.xlu0 %50
    %54 = vset.pattern.permute.xlu0 0
    %55 = vperm.xlu0 %54, %v37
    %v56 = vpop.permute.xlu0 %55
    %vm58 = vcmask 261120
    %v60 = vsel %vm58, %v30, 0
    %v63 = vsel %vm58, %v31, 0
    %v66 = vsel %vm58, %v32, 0
    %v69 = vsel %vm58, %v33, 0
    %v72 = vsel %vm58, %v29, 0
    %74 = vmatpush.xpose.msra.mxu0 0.0
    %75 = vmatpush.xpose.msra.mxu0 0.0
    %76 = vmatpush.xpose.msra.mxu0 0.0
    %77 = vmatpush.xpose.msra.mxu0 0.0
    %78 = vmatpush.xpose.msra.mxu0 0.0
    %79 = vmatpush.xpose.msra.mxu0 0.0
    %80 = vmatpush.xpose.msra.mxu0 0.0
    %81 = vmatpush.xpose.msra.mxu0 0.0
    %82 = vmatpush.xpose.msra.mxu0 0.0
    %83 = vmatpush.xpose.msra.mxu0 0.0
    %84 = vmatpush.xpose.msra.mxu0 0.0
    %85 = vmatpush.xpose.msra.mxu0 0.0
    %86 = vmatpush.xpose.msra.mxu0 0.0
    %87 = vmatpush.xpose.msra.mxu0 0.0
    %88 = vmatpush.xpose.msra.mxu0 0.0
    %89 = vmatpush.xpose.msra.mxu0 %v72
    %90 = vmatmul.f32.gmra.mxu0 %v60
    %v91 = vpop.f32.mrf.mxu0
    %v92 = vadd.f32 %v41, %v91
    %93 = vmatmul.f32.gmra.mxu0 %v63
    %v94 = vpop.f32.mrf.mxu0
    %v95 = vadd.f32 %v46, %v94
    %96 = vmatmul.f32.gmra.mxu0 %v66
    %v97 = vpop.f32.mrf.mxu0
    %v98 = vadd.f32 %v51, %v97
    %99 = vmatmul.f32.gmra.mxu0 %v69
    %v100 = vpop.f32.mrf.mxu0
    %v101 = vadd.f32 %v56, %v100
    %102 = vdwg.mxu0
    %v103 = vmax.f32 %v92, 0.0
    %v104 = vmax.f32 %v95, 0.0
    %v105 = vmax.f32 %v98, 0.0
    %v106 = vmax.f32 %v101, 0.0
    %v107 = vld [vmem:[%s3] sm:$0xff]
    %v108 = vld [vmem:[%s3 + $0x8] sm:$0xff]
    %v109 = vld [vmem:[%s3 + $0x10] sm:$0xff]
    %v110 = vld [vmem:[%s3 + $0x18] sm:$0xff]
    %v111 = vld [vmem:[%s4] sm:$0xff]
    %v112 = vld [vmem:[%s4 + $0x8] sm:$0xff]
    %v113 = vld [vmem:[%s4 + $0x10] sm:$0xff]
    %v114 = vld [vmem:[%s4 + $0x18] sm:$0xff]
    %116 = vset.pattern.permute.xlu0 0
    %117 = vperm.xlu0 %116, %v111
    %v118 = vpop.permute.xlu0 %117
    %121 = vset.pattern.permute.xlu0 0
    %122 = vperm.xlu0 %121, %v112
    %v123 = vpop.permute.xlu0 %122
    %126 = vset.pattern.permute.xlu0 0
    %127 = vperm.xlu0 %126, %v113
    %v128 = vpop.permute.xlu0 %127
    %131 = vset.pattern.permute.xlu0 0
    %132 = vperm.xlu0 %131, %v114
    %v133 = vpop.permute.xlu0 %132
    %v136 = vsel %vm58, %v107, 0
    %v139 = vsel %vm58, %v108, 0
    %v142 = vsel %vm58, %v109, 0
    %v145 = vsel %vm58, %v110, 0
    %147 = vmatpush.msra.mxu0 0.0
    %148 = vmatpush.msra.mxu0 0.0
    %149 = vmatpush.msra.mxu0 0.0
    %150 = vmatpush.msra.mxu0 0.0
    %151 = vmatpush.msra.mxu0 0.0
    %152 = vmatpush.msra.mxu0 0.0
    %153 = vmatpush.msra.mxu0 0.0
    %154 = vmatpush.msra.mxu0 0.0
    %155 = vmatpush.msra.mxu0 0.0
    %156 = vmatpush.msra.mxu0 0.0
    %157 = vmatpush.msra.mxu0 0.0
    %158 = vmatpush.msra.mxu0 0.0
    %159 = vmatpush.msra.mxu0 %v106
    %160 = vmatpush.msra.mxu0 %v105
    %161 = vmatpush.msra.mxu0 %v104
    %162 = vmatpush.msra.mxu0 %v103
    %163 = vmatmul.f32.gmra.mxu0 %v136
    %v164 = vpop.f32.mrf.mxu0
    %v165 = vadd.f32 %v118, %v164
    %166 = vmatmul.f32.gmra.mxu0 %v139
    %v167 = vpop.f32.mrf.mxu0
    %v168 = vadd.f32 %v123, %v167
    %169 = vmatmul.f32.gmra.mxu0 %v142
    %v170 = vpop.f32.mrf.mxu0
    %v171 = vadd.f32 %v128, %v170
    %172 = vmatmul.f32.gmra.mxu0 %v145
    %v173 = vpop.f32.mrf.mxu0
    %v174 = vadd.f32 %v133, %v173
    %175 = vdwg.mxu0
    %v176 = vmax.f32 %v165, 0.0
    %v177 = vmax.f32 %v168, 0.0
    %v178 = vmax.f32 %v171, 0.0
    %v179 = vmax.f32 %v174, 0.0
    %v180 = vld [vmem:[%s5] sm:$0xff]
    %v181 = vld [vmem:[%s5 + $0x8] sm:$0xff]
    %v182 = vld [vmem:[%s5 + $0x10] sm:$0xff]
    %v183 = vld [vmem:[%s5 + $0x18] sm:$0xff]
    %v184 = vld [vmem:[#allocation2] sm:$0x1]
    %186 = vset.pattern.permute.xlu0 0
    %187 = vperm.xlu0 %186, %v180
    %v188 = vpop.permute.xlu0 %187
    %191 = vset.pattern.permute.xlu0 0
    %192 = vperm.xlu0 %191, %v181
    %v193 = vpop.permute.xlu0 %192
    %196 = vset.pattern.permute.xlu0 0
    %197 = vperm.xlu0 %196, %v182
    %v198 = vpop.permute.xlu0 %197
    %201 = vset.pattern.permute.xlu0 0
    %202 = vperm.xlu0 %201, %v183
    %v203 = vpop.permute.xlu0 %202
    %v205 = vmul.f32 %v176, %v188
    %v206 = vmul.f32 %v177, %v193
    %v207 = vmul.f32 %v178, %v198
    %v208 = vmul.f32 %v179, %v203
    %vm209 = vcmask 64512
    %v210 = vsel %vm209, %v205, 0.0
    %v211 = vsel %vm209, %v206, 0.0
    %v212 = vadd.f32 %v210, %v211
    %v213 = vsel %vm209, %v207, 0.0
    %v214 = vadd.f32 %v212, %v213
    %v215 = vsel %vm209, %v208, 0.0
    %v216 = vadd.f32 %v214, %v215
    %v217 = vrot.slane %v216, 4
    %v218 = vadd.f32 %v216, %v217
    %v219 = vrot.slane %v218, 2
    %v220 = vadd.f32 %v218, %v219
    %v221 = vrot.slane %v220, 1
    %v222 = vadd.f32 %v220, %v221
    %224 = vset.pattern.permute.xlu0 0
    %225 = vperm.xlu0 %224, %v184
    %v226 = vpop.permute.xlu0 %225
    %v228 = vperm.slane %v226, 0
    %v229 = vadd.f32 %v222, %v228
    %vm230 = vcmask 57344
    %231 = vst.msk [vmem:[#allocation3] sm:$0x1] %vm230, %v229
    // Predicated region
    $region30: #{qnet_forward.1} parent=1 // pred_check
      _
    $region31: #{qnet_forward.1} parent=1 // pred_check_branch
      %233 = sbr.rel (0) target = $region33
    $region32: #{qnet_forward.1} parent=1 // pred_region
      %235 = vsyncadd [#allocation4], 0
      %s237 = sshll.u32 [#allocation3], 4
      %s238 = int_to_ptr.vmem [resolvable:$true] %s237
      %s239 = sshll.u32 %s7, 4
      %s240 = int_to_ptr.hbm [resolvable:$true] %s239
      %242 = dma.vmem_to_hbm [thread:$0]  %s238, 16, %s240, [#allocation4]
    $region33: #{qnet_forward.1} parent=1 // pred_fallthru
      _
    // Predicated region
    $region34: #{qnet_forward.1} parent=1 // pred_check
      _
    $region35: #{qnet_forward.1} parent=1 // pred_check_branch
      %244 = sbr.rel (0) target = $region37
    $region36: #{qnet_forward.1} parent=1 // pred_region
      %246 = dma.done [#allocation4], 16
    $region37: #{qnet_forward.1} parent=1 // pred_fallthru
      _
    %247 = vsyncpa [#allocation4], 1

</llo_original>
